<compile_context>
chip_gen: v6e
topology: v6e:2x2x1
jax: 0.10.0
libtpu: 0.0.40
codegen_flags: <defaults>
</compile_context>

<pallas_src>
import functools

import jax
import jax.numpy as jnp
from jax.experimental import pallas as pl
from jax.experimental.pallas import tpu as pltpu

_LANES = 128
_SUBLANES = 8
_MAX_BLOCK_ROWS = 2048      # (2048, 128) f32 = 1 MiB/tile; 2 inputs x 2 bufs = 4 MiB


def _focal_loss_kernel(x_ref, t_ref, o_ref, acc_ref, *, alpha, gamma, logits,
                       tm, steps_per_core, n_valid, need_mask):
    c = pl.program_id(0)            # core split ("parallel")
    s = pl.program_id(1)            # sequential steps per core ("arbitrary")

    @pl.when(s == 0)
    def _():
        acc_ref[...] = jnp.zeros_like(acc_ref)

    x = x_ref[...].astype(jnp.float32)
    t = t_ref[...].astype(jnp.float32)

    if logits:
        # binary_cross_entropy_with_logits (numerically stable form)
        bce = jnp.maximum(x, 0.0) - x * t + jnp.log1p(jnp.exp(-jnp.abs(x)))
    else:
        # binary_cross_entropy: PyTorch clamps the log terms at -100
        log_p = jnp.maximum(jnp.log(x), -100.0)
        log_1mp = jnp.maximum(jnp.log(1.0 - x), -100.0)
        bce = -(t * log_p + (1.0 - t) * log_1mp)

    pt = jnp.exp(-bce)
    one_m_pt = 1.0 - pt
    g = float(gamma)
    if g == 2.0:
        focal = one_m_pt * one_m_pt          # explicit square: no pow -> no extra EUP
    elif g == 1.0:
        focal = one_m_pt
    elif g == 0.0:
        focal = jnp.ones_like(one_m_pt)
    else:
        focal = one_m_pt ** g
    f_loss = alpha * focal * bce

    if need_mask:
        # Zero out positions past the valid element count (covers both the
        # zero-padded lane tail and garbage rows of a partial last block).
        block_idx = c * steps_per_core + s
        row = block_idx * tm + jax.lax.broadcasted_iota(jnp.int32, (tm, _LANES), 0)
        lane = jax.lax.broadcasted_iota(jnp.int32, (tm, _LANES), 1)
        full_rows = n_valid // _LANES
        rem = n_valid % _LANES
        valid = (row < full_rows) | ((row == full_rows) & (lane < rem))
        f_loss = jnp.where(valid, f_loss, 0.0)

    # Vector-wide accumulation: pure VPU adds every step (no per-step XLU
    # cross-lane reduce, no serial scalar SMEM read-modify-write chain).
    acc_ref[...] += jnp.sum(f_loss.reshape(tm // _SUBLANES, _SUBLANES, _LANES),
                            axis=0)

    # Single cross-lane reduce, once, at the end of this core's chunk.
    @pl.when(s == pl.num_programs(1) - 1)
    def _():
        o_ref[0, 0] = jnp.sum(acc_ref[...])


def focal_loss(inputs, targets, *, alpha=1.0, gamma=2.0, logits=False,
               reduction="mean"):
    """Pallas TPU implementation of FocalLoss.forward."""
    if reduction == "mean":
        scale = 1.0 / inputs.size
    elif reduction == "sum":
        scale = 1.0
    else:
        raise ValueError(f"unsupported reduction: {reduction}")

    n = inputs.size
    x = inputs.reshape(-1)          # row-major reshape: no data movement
    t = targets.reshape(-1)

    chunk = _SUBLANES * _LANES      # 1024
    n_padded = pl.cdiv(n, chunk) * chunk
    if n_padded != n:
        # Rare path (numel not a multiple of 1024): small zero-pad, masked
        # in-kernel so the pad value does not matter.
        x = jnp.pad(x, (0, n_padded - n))
        t = jnp.pad(t, (0, n_padded - n))

    x2 = x.reshape(-1, _LANES)
    t2 = t.reshape(-1, _LANES)
    rows = x2.shape[0]                              # multiple of 8

    tm = min(_MAX_BLOCK_ROWS, rows)                 # multiple of 8
    num_blocks = pl.cdiv(rows, tm)
    # Split the row blocks 2-way across TensorCores when it divides evenly
    # (second TC on v7x-class chips; harmless serial loop on 1-TC chips).
    p = 2 if (num_blocks % 2 == 0 and num_blocks >= 2) else 1
    steps = num_blocks // p
    need_mask = (num_blocks * tm != rows) or (n_padded != n)

    kernel = functools.partial(
        _focal_loss_kernel,
        alpha=float(alpha), gamma=float(gamma), logits=bool(logits),
        tm=tm, steps_per_core=steps, n_valid=n, need_mask=need_mask)

    partials = pl.pallas_call(
        kernel,
        out_shape=jax.ShapeDtypeStruct((p, 1), jnp.float32),
        grid_spec=pltpu.PrefetchScalarGridSpec(
            num_scalar_prefetch=0,
            grid=(p, steps),
            in_specs=[
                pl.BlockSpec((tm, _LANES), lambda c, s, S=steps: (c * S + s, 0)),
                pl.BlockSpec((tm, _LANES), lambda c, s, S=steps: (c * S + s, 0)),
            ],
            out_specs=pl.BlockSpec((1, 1), lambda c, s: (c, 0),
                                   memory_space=pltpu.SMEM),
            scratch_shapes=[pltpu.VMEM((_SUBLANES, _LANES), jnp.float32)]),
        compiler_params=pltpu.CompilerParams(
            dimension_semantics=("parallel", "arbitrary")),
    )(x2, t2)
    return jnp.sum(partials) * scale


def _focal_loss_ref(inputs, targets, alpha=1.0, gamma=2.0, logits=False,
                    reduction="mean"):
    x = inputs.astype(jnp.float32)
    t = targets.astype(jnp.float32)
    if logits:
        bce = jnp.maximum(x, 0.0) - x * t + jnp.log1p(jnp.exp(-jnp.abs(x)))
    else:
        bce = -(t * jnp.maximum(jnp.log(x), -100.0)
                + (1.0 - t) * jnp.maximum(jnp.log(1.0 - x), -100.0))
    pt = jnp.exp(-bce)
    f = alpha * (1.0 - pt) ** gamma * bce
    return f.mean() if reduction == "mean" else f.sum()


if __name__ == "__main__":
    key = jax.random.PRNGKey(0)
    k1, k2, k3, k4 = jax.random.split(key, 4)

    # Primary case: FocalLoss() defaults (probabilities in, mean reduction).
    B, C, H, W = 2, 4, 16, 16
    inputs = jax.random.uniform(k1, (B, C, H, W), jnp.float32,
                                minval=1e-4, maxval=1.0 - 1e-4)
    targets = jax.random.bernoulli(k2, 0.5, (B, C, H, W)).astype(jnp.float32)

    out = jax.block_until_ready(focal_loss(inputs, targets))
    ref = _focal_loss_ref(inputs, targets)
    assert jnp.allclose(out, ref, rtol=1e-5, atol=1e-6), (out, ref)

    # logits=True + sum reduction.
    logits_in = jax.random.normal(k3, (B, C, H, W), jnp.float32) * 3.0
    out2 = jax.block_until_ready(focal_loss(logits_in, targets,
                                            logits=True, reduction="sum"))
    ref2 = _focal_loss_ref(logits_in, targets, logits=True, reduction="sum")
    assert jnp.allclose(out2, ref2, rtol=1e-5, atol=1e-5), (out2, ref2)

    # numel not a multiple of 1024 -> exercises the in-kernel masking path.
    odd = (3, 5, 7, 11)
    x_odd = jax.random.uniform(k4, odd, jnp.float32, minval=1e-4, maxval=1.0 - 1e-4)
    t_odd = jax.random.bernoulli(k2, 0.5, odd).astype(jnp.float32)
    out3 = jax.block_until_ready(focal_loss(x_odd, t_odd))
    ref3 = _focal_loss_ref(x_odd, t_odd)
    assert jnp.allclose(out3, ref3, rtol=1e-5, atol=1e-6), (out3, ref3)

    # Large enough to use full (2048, 128) tiles, multiple grid steps, and the
    # 2-way core split.
    big = (2, 8, 256, 256)   # 1,048,576 elements -> 8192 rows -> 4 blocks
    x_big = jax.random.uniform(k1, big, jnp.float32, minval=1e-4, maxval=1.0 - 1e-4)
    t_big = jax.random.bernoulli(k3, 0.5, big).astype(jnp.float32)
    out4 = jax.block_until_ready(focal_loss(x_big, t_big))
    ref4 = _focal_loss_ref(x_big, t_big)
    assert jnp.allclose(out4, ref4, rtol=1e-4, atol=1e-6), (out4, ref4)

    print("KERNEL_OK")
</pallas_src>

<mosaic_0001>
module attributes {stable_mosaic.version = 11 : i64} {
  func.func @_focal_loss_kernel(%arg0: i32, %arg1: i32, %arg2: memref<16x128xf32, #tpu.memory_space<vmem>>, %arg3: memref<16x128xf32, #tpu.memory_space<vmem>>, %arg4: memref<1x1xf32, #tpu.memory_space<smem>>, %arg5: memref<8x128xf32, #tpu.memory_space<vmem>>) attributes {dimension_semantics = [#tpu.dimension_semantics<parallel>, #tpu.dimension_semantics<arbitrary>], iteration_bounds = array<i64: 1, 1>, scalar_prefetch = 0 : i64, scratch_operands = 1 : i64, tpu.core_type = #tpu.core_type<tc>, window_params = [{transform_indices = @transform_0, window_bounds = array<i64: 16, 128>}, {transform_indices = @transform_1, window_bounds = array<i64: 16, 128>}, {transform_indices = @transform_2, window_bounds = array<i64: 1, 1>}]} {
    %c0_i32 = arith.constant 0 : i32
    %0 = arith.cmpi eq, %arg1, %c0_i32 : i32
    %1 = arith.extui %0 : i1 to i32
    %c0_i32_0 = arith.constant 0 : i32
    %2 = arith.cmpi ne, %1, %c0_i32_0 : i32
    scf.if %2 {
      %cst_18 = arith.constant 0.000000e+00 : f32
      %37 = vector.broadcast %cst_18 : f32 to vector<8x128xf32>
      %c0_19 = arith.constant 0 : index
      %c0_20 = arith.constant 0 : index
      %38 = vector.load %arg5[%c0_19, %c0_20] : memref<8x128xf32, #tpu.memory_space<vmem>>, vector<8x128xf32>
      tpu.vector_store %arg5[%c0_19, %c0_20], %37 {strides = array<i32>} : memref<8x128xf32, #tpu.memory_space<vmem>>, vector<8x128xf32>,
    } else {
    }
    %c0 = arith.constant 0 : index
    %c0_1 = arith.constant 0 : index
    %3 = vector.load %arg2[%c0, %c0_1] : memref<16x128xf32, #tpu.memory_space<vmem>>, vector<16x128xf32>
    %c0_2 = arith.constant 0 : index
    %c0_3 = arith.constant 0 : index
    %4 = vector.load %arg3[%c0_2, %c0_3] : memref<16x128xf32, #tpu.memory_space<vmem>>, vector<16x128xf32>
    %5 = math.log %3 : vector<16x128xf32>
    %cst = arith.constant -1.000000e+02 : f32
    %6 = vector.broadcast %cst : f32 to vector<16x128xf32>
    %7 = arith.maximumf %5, %6 : vector<16x128xf32>
    %cst_4 = arith.constant 1.000000e+00 : f32
    %8 = vector.broadcast %cst_4 : f32 to vector<16x128xf32>
    %9 = arith.subf %8, %3 : vector<16x128xf32>
    %10 = math.log %9 : vector<16x128xf32>
    %cst_5 = arith.constant -1.000000e+02 : f32
    %11 = vector.broadcast %cst_5 : f32 to vector<16x128xf32>
    %12 = arith.maximumf %10, %11 : vector<16x128xf32>
    %13 = arith.mulf %4, %7 : vector<16x128xf32>
    %cst_6 = arith.constant 1.000000e+00 : f32
    %14 = vector.broadcast %cst_6 : f32 to vector<16x128xf32>
    %15 = arith.subf %14, %4 : vector<16x128xf32>
    %16 = arith.mulf %15, %12 : vector<16x128xf32>
    %17 = arith.addf %13, %16 : vector<16x128xf32>
    %cst_7 = arith.constant 0.000000e+00 : f32
    %18 = vector.broadcast %cst_7 : f32 to vector<16x128xf32>
    %19 = arith.subf %18, %17 : vector<16x128xf32>
    %cst_8 = arith.constant 0.000000e+00 : f32
    %20 = vector.broadcast %cst_8 : f32 to vector<16x128xf32>
    %21 = arith.subf %20, %19 : vector<16x128xf32>
    %22 = math.exp %21 : vector<16x128xf32>
    %cst_9 = arith.constant 1.000000e+00 : f32
    %23 = vector.broadcast %cst_9 : f32 to vector<16x128xf32>
    %24 = arith.subf %23, %22 : vector<16x128xf32>
    %25 = arith.mulf %24, %24 : vector<16x128xf32>
    %cst_10 = arith.constant 1.000000e+00 : f32
    %26 = vector.broadcast %cst_10 : f32 to vector<16x128xf32>
    %27 = arith.mulf %26, %25 : vector<16x128xf32>
    %28 = arith.mulf %27, %19 : vector<16x128xf32>
    %c0_11 = arith.constant 0 : index
    %c0_12 = arith.constant 0 : index
    %29 = vector.load %arg5[%c0_11, %c0_12] : memref<8x128xf32, #tpu.memory_space<vmem>>, vector<8x128xf32>
    %30 = vector.shape_cast %28 : vector<16x128xf32> to vector<2x8x128xf32>
    %cst_13 = arith.constant dense<0.000000e+00> : vector<8x128xf32>
    %31 = vector.multi_reduction <add>, %30, %cst_13 [0] : vector<2x8x128xf32> to vector<8x128xf32>
    %32 = arith.addf %29, %31 : vector<8x128xf32>
    %c0_14 = arith.constant 0 : index
    %c0_15 = arith.constant 0 : index
    %33 = vector.load %arg5[%c0_14, %c0_15] : memref<8x128xf32, #tpu.memory_space<vmem>>, vector<8x128xf32>
    tpu.vector_store %arg5[%c0_14, %c0_15], %32 {strides = array<i32>} : memref<8x128xf32, #tpu.memory_space<vmem>>, vector<8x128xf32>,
    %c0_i32_16 = arith.constant 0 : i32
    %34 = arith.cmpi eq, %arg1, %c0_i32_16 : i32
    %35 = arith.extui %34 : i1 to i32
    %c0_i32_17 = arith.constant 0 : i32
    %36 = arith.cmpi ne, %35, %c0_i32_17 : i32
    scf.if %36 {
      %c0_18 = arith.constant 0 : index
      %c0_19 = arith.constant 0 : index
      %37 = vector.load %arg5[%c0_18, %c0_19] : memref<8x128xf32, #tpu.memory_space<vmem>>, vector<8x128xf32>
      %38 = vector.shape_cast %37 : vector<8x128xf32> to vector<1x8x128xf32>
      %cst_20 = arith.constant dense<0.000000e+00> : vector<1xf32>
      %39 = vector.multi_reduction <add>, %38, %cst_20 [1, 2] : vector<1x8x128xf32> to vector<1xf32>
      %40 = vector.shape_cast %39 : vector<1xf32> to vector<1x1x1xf32>
      %41 = vector.extract %40[0, 0, 0] : f32 from vector<1x1x1xf32>
      %c0_21 = arith.constant 0 : index
      %c0_22 = arith.constant 0 : index
      %42 = memref.load %arg4[%c0_21, %c0_22] : memref<1x1xf32, #tpu.memory_space<smem>>
      memref.store %41, %arg4[%c0_21, %c0_22] : memref<1x1xf32, #tpu.memory_space<smem>>
    } else {
    }
    return
  }
  func.func @transform_0(%arg0: i32, %arg1: i32) -> (i32, i32) {
    %c1_i32 = arith.constant 1 : i32
    %0 = arith.muli %arg0, %c1_i32 : i32
    %1 = arith.addi %0, %arg1 : i32
    %c0_i32 = arith.constant 0 : i32
    %c0_i32_0 = arith.constant 0 : i32
    return %1, %c0_i32 : i32, i32
  }
  func.func @transform_1(%arg0: i32, %arg1: i32) -> (i32, i32) {
    %c1_i32 = arith.constant 1 : i32
    %0 = arith.muli %arg0, %c1_i32 : i32
    %1 = arith.addi %0, %arg1 : i32
    %c0_i32 = arith.constant 0 : i32
    %c0_i32_0 = arith.constant 0 : i32
    return %1, %c0_i32 : i32, i32
  }
  func.func @transform_2(%arg0: i32, %arg1: i32) -> (i32, i32) {
    %c0_i32 = arith.constant 0 : i32
    %c0_i32_0 = arith.constant 0 : i32
    return %arg0, %c0_i32 : i32, i32
  }
}

</mosaic_0001>

<llo_original>
// kernel: tpu_custom_call.1
$region0: #{tpu_custom_call.1}
  #allocation0 [shape = 'u32[]', space=smem, size = 0x4, offset = 0x4, fixed_abs, tag = 'smem constant byte address 0x4 - core index']
  #allocation1 [shape = 'u32[144,128]{1,0:T(1,128)}', space=vmem, size = 0x12000, scoped, tag = 'internal scratch']
  #allocation2 [shape = 'f32[8,128]{1,0:T(8,128)}', space=vmem, size = 0x1000, scoped, tag = 'scratch operand']
  %s0 = inlined_call_operand.hbm [shape: f32[16,128], index: 0, kind: input, shape index: {}]
  %s1 = inlined_call_operand.hbm [shape: f32[16,128], index: 1, kind: input, shape index: {}]
  %s2 = inlined_call_operand.hbm [shape: f32[1,1], index: 2, kind: output, shape index: {}]
  %s3 = sld [smem:[#allocation0]]
  $region34: #{tpu_custom_call.1} parent=0
    _
  %s5 = ssub.s32 1, %s3
  %s6 = scalar_select 0, %s5, %s3
  $region1: #{tpu_custom_call.1} parent=0
    #allocation3 [shape = 'u8[8192]{0}', space=vmem, size = 0x2000, scoped, tag = 'input window, operand 0, single buffered']
    #allocation4 [shape = 's32[1]{0}', space=sflag, size = 0x4, scoped, tag = 'scoped memory for tpu_custom_call.1']
    #allocation5 [shape = 's32[1]{0}', space=sflag, size = 0x4, scoped, tag = 'scoped memory for tpu_custom_call.1']
    #allocation6 [shape = 'u8[8192]{0}', space=vmem, size = 0x2000, scoped, tag = 'input window, operand 1, single buffered']
    #allocation7 [shape = 's32[1]{0}', space=sflag, size = 0x4, scoped, tag = 'scoped memory for tpu_custom_call.1']
    #allocation8 [shape = 'u8[512]{0}', space=smem, size = 0x200, scoped, tag = 'output window, operand 0, single buffered']
    %7 = vsyncpa [#allocation4], 0
    %8 = vsyncpa [#allocation7], 0
    %9 = vsyncpa [#allocation5], 0
    // Predicated region
    $region2: #{tpu_custom_call.1} parent=1 // pred_check
      _
    $region3: #{tpu_custom_call.1} parent=1 // pred_check_branch
      %11 = sbr.rel (0) target = $region5
    $region4: #{tpu_custom_call.1} parent=1 // pred_region
      %s12 = sadd.s32 0, 0
      %s13 = smul.u32 2, %s12
      %s15 = ssub.s32 256, 256
      %16 = vsyncadd [#allocation4], %s15
      %s17 = smul.addr %s13, 128
      %s18 = scalar_lea.hbm %s0, %s17
      %s19 = sshll.u32 [#allocation3], 4
      %s20 = int_to_ptr.vmem [resolvable:$true] %s19
      %25 = dma.hbm_to_vmem [thread:$0]  %s18, 256, %s20, [#allocation4], 128, 128, 8
    $region5: #{tpu_custom_call.1} parent=1 // pred_fallthru
      _
    // Predicated region
    $region6: #{tpu_custom_call.1} parent=1 // pred_check
      _
    $region7: #{tpu_custom_call.1} parent=1 // pred_check_branch
      %27 = sbr.rel (0) target = $region9
    $region8: #{tpu_custom_call.1} parent=1 // pred_region
      %s28 = sadd.s32 0, 0
      %s29 = smul.u32 2, %s28
      %s31 = ssub.s32 256, 256
      %32 = vsyncadd [#allocation7], %s31
      %s33 = smul.addr %s29, 128
      %s34 = scalar_lea.hbm %s1, %s33
      %s35 = sshll.u32 [#allocation6], 4
      %s36 = int_to_ptr.vmem [resolvable:$true] %s35
      %41 = dma.hbm_to_vmem [thread:$0]  %s34, 256, %s36, [#allocation7], 128, 128, 8
    $region9: #{tpu_custom_call.1} parent=1 // pred_fallthru
      _
    // Predicated region
    $region10: #{tpu_custom_call.1} parent=1 // pred_check
      _
    $region11: #{tpu_custom_call.1} parent=1 // pred_check_branch
      %43 = sbr.rel (0) target = $region13
    $region12: #{tpu_custom_call.1} parent=1 // pred_region
      %44 = dma.done [#allocation4], 256
    $region13: #{tpu_custom_call.1} parent=1 // pred_fallthru
      _
    // Predicated region
    $region14: #{tpu_custom_call.1} parent=1 // pred_check
      _
    $region15: #{tpu_custom_call.1} parent=1 // pred_check_branch
      %46 = sbr.rel (0) target = $region17
    $region16: #{tpu_custom_call.1} parent=1 // pred_region
      %47 = dma.done [#allocation7], 256
    $region17: #{tpu_custom_call.1} parent=1 // pred_fallthru
      _
    %s48 = sadd.s32 0, 0
    %s49 = smul.u32 2, %s48
    %s50 = sadd.s32 0, 0
    %s51 = smul.u32 2, %s50
    %p52 = scmp.eq.s32.totalorder 0, 0
    // Predicated region
    $region18: #{tpu_custom_call.1} parent=1 // pred_check
      %p53 = pneg %p52
    $region19: #{tpu_custom_call.1} parent=1 // pred_check_branch
      %55 = sbr.rel (%p53) target = $region21
    $region20: #{tpu_custom_call.1} parent=1 // pred_region
      %56 = vst [vmem:[#allocation2] sm:$0xff] 0.0
    $region21: #{tpu_custom_call.1} parent=1 // pred_fallthru
      _
    %v57 = vld [vmem:[#allocation3] sm:$0xff]
    %v58 = vld [vmem:[#allocation3 + $0x8] sm:$0xff]
    %v59 = vld [vmem:[#allocation6] sm:$0xff]
    %v60 = vld [vmem:[#allocation6 + $0x8] sm:$0xff]
    %v61 = vlog2.pop %v57
    %v62 = vmul.f32 %v61, 0.6931472
    %v63 = vlog2.pop %v58
    %v64 = vmul.f32 %v63, 0.6931472
    %v65 = vmax.f32 %v62, -100.0
    %v66 = vmax.f32 %v64, -100.0
    %v67 = vsub.f32 1.0, %v57
    %v68 = vsub.f32 1.0, %v58
    %v69 = vlog2.pop %v67
    %v70 = vmul.f32 %v69, 0.6931472
    %v71 = vlog2.pop %v68
    %v72 = vmul.f32 %v71, 0.6931472
    %v73 = vmax.f32 %v70, -100.0
    %v74 = vmax.f32 %v72, -100.0
    %v75 = vmul.f32 %v59, %v65
    %v76 = vmul.f32 %v60, %v66
    %v77 = vsub.f32 1.0, %v59
    %v78 = vsub.f32 1.0, %v60
    %v79 = vmul.f32 %v77, %v73
    %v80 = vmul.f32 %v78, %v74
    %v81 = vadd.f32 %v75, %v79
    %v82 = vadd.f32 %v76, %v80
    %v83 = vsub.f32 0.0, %v81
    %v84 = vsub.f32 0.0, %v82
    %v85 = vsub.f32 0.0, %v83
    %v86 = vsub.f32 0.0, %v84
    %v87 = vmul.f32 %v85, 1.442695
    %v88 = vpow.pop %v87
    %v89 = vmul.f32 %v86, 1.442695
    %v90 = vpow.pop %v89
    %v91 = vsub.f32 1.0, %v88
    %v92 = vsub.f32 1.0, %v90
    %v93 = vmul.f32 %v91, %v91
    %v94 = vmul.f32 %v92, %v92
    %v95 = vmul.f32 %v93, %v83
    %v96 = vmul.f32 %v94, %v84
    %v97 = vld [vmem:[#allocation2] sm:$0xff]
    %v98 = vadd.f32 %v95, %v96
    %v99 = vadd.f32 %v97, %v98
    %100 = vst [vmem:[#allocation2] sm:$0xff] %v99
    // Predicated region
    $region22: #{tpu_custom_call.1} parent=1 // pred_check
      %p101 = pneg %p52
    $region23: #{tpu_custom_call.1} parent=1 // pred_check_branch
      %103 = sbr.rel (%p101) target = $region25
    $region24: #{tpu_custom_call.1} parent=1 // pred_region
      %v104 = vld [vmem:[#allocation2] sm:$0xff]
      %105 = vadd.xlane.f32.xlu0 %v104
      %v106 = vpop.xlane.xlu0 %105
      %v107 = vrot.slane %v106, 4
      %v108 = vadd.f32 %v106, %v107
      %v109 = vrot.slane %v108, 2
      %v110 = vadd.f32 %v108, %v109
      %v111 = vrot.slane %v110, 1
      %v112 = vadd.f32 %v110, %v111
      %s113 = vtos %v112
      %s114 = scalar_lea.smem [#allocation8], 0
      %115 = sst [smem:[%s114]] %s113
    $region25: #{tpu_custom_call.1} parent=1 // pred_fallthru
      _
    // Predicated region
    $region26: #{tpu_custom_call.1} parent=1 // pred_check
      _
    $region27: #{tpu_custom_call.1} parent=1 // pred_check_branch
      %117 = sbr.rel (0) target = $region29
    $region28: #{tpu_custom_call.1} parent=1 // pred_region
      %s119 = ssub.s32 16, 16
      %120 = vsyncadd [#allocation5], %s119
      %123 = dma.smem_to_hbm [#allocation8], 16, %s2, [#allocation5]
    $region29: #{tpu_custom_call.1} parent=1 // pred_fallthru
      _
    // Predicated region
    $region30: #{tpu_custom_call.1} parent=1 // pred_check
      _
    $region31: #{tpu_custom_call.1} parent=1 // pred_check_branch
      %125 = sbr.rel (0) target = $region33
    $region32: #{tpu_custom_call.1} parent=1 // pred_region
      %126 = dma.done [#allocation5], 16
    $region33: #{tpu_custom_call.1} parent=1 // pred_fallthru
      _
    %127 = sfence
    %128 = vsyncpa [#allocation4], 1
    %129 = vsyncpa [#allocation7], 1
    %130 = vsyncpa [#allocation5], 1

</llo_original>
